<compile_context>
chip_gen: v5e
topology: v5e:2x2
jax: 0.10.0
libtpu: 0.0.40
codegen_flags: <defaults>
</compile_context>

<pallas_src>
import jax
import jax.numpy as jnp
from jax import lax
from jax.experimental import pallas as pl
from jax.experimental.pallas import tpu as pltpu

LN_EPS = 1e-12


def _round_up(x, m):
    return ((x + m - 1) // m) * m


def bert_output_kernel(h_ref, w_ref, b_ref, res_ref, gamma_ref, beta_ref, o_ref):
    # Dense: [tm, I] @ [I, H] -> [tm, H] on the MXU, f32 accumulation.
    x = jnp.dot(h_ref[...], w_ref[...], preferred_element_type=jnp.float32)
    x = x + b_ref[...].astype(jnp.float32)
    # Dropout is identity in eval / inference mode.
    # TODO(synk): training-mode dropout (pltpu.prng_random_bits mask) not implemented.
    x = x + res_ref[...].astype(jnp.float32)
    # LayerNorm over the hidden dim, eps = 1e-12 (matches BertLayerNorm).
    mean = jnp.mean(x, axis=-1, keepdims=True)
    centered = x - mean
    var = jnp.mean(centered * centered, axis=-1, keepdims=True)
    xn = centered * lax.rsqrt(var + LN_EPS)
    out = xn * gamma_ref[...].astype(jnp.float32) + beta_ref[...].astype(jnp.float32)
    o_ref[...] = out.astype(o_ref.dtype)


def _block_bytes(tm, inter, hidden, cbytes, rbytes, obytes):
    """Double-buffered per-step footprint + resident weight/params."""
    est = 2 * (tm * inter * cbytes + tm * hidden * rbytes + tm * hidden * obytes)
    est += 2 * inter * hidden * cbytes          # resident weight (double-buffer alloc)
    est += 6 * hidden * 4                        # bias / gamma / beta (1, H) blocks
    return est


def bert_output(hidden_states, input_tensor, w, b, gamma, beta, *,
                tile_rows=256, compute_dtype=jnp.bfloat16,
                alias_residual=False):
    """hidden_states: [rows, intermediate], input_tensor: [rows, hidden]."""
    rows, inter = hidden_states.shape
    hidden = input_tensor.shape[-1]
    out_dtype = hidden_states.dtype

    cbytes = jnp.dtype(compute_dtype).itemsize
    rbytes = jnp.dtype(input_tensor.dtype).itemsize
    obytes = jnp.dtype(out_dtype).itemsize

    # Row tile: as large as requested, clamped to the (8-rounded) row count and
    # kept a multiple of 8 so the (8, 128) block rule holds. Shrink (halve) the
    # tile until the double-buffered footprint fits a 48 MiB budget so the same
    # kernel is safe on v7x (64 MiB VMEM/TC) as well as v5e/v6e (128 MiB).
    budget = 48 << 20
    tm = max(8, min(_round_up(int(tile_rows), 8), _round_up(rows, 8)))
    while tm > 8 and _block_bytes(tm, inter, hidden, cbytes, rbytes, obytes) > budget:
        tm = max(8, _round_up(tm // 2, 8))
    rows_p = _round_up(rows, tm)

    hs = hidden_states.astype(compute_dtype)     # bf16 matmul operand
    wc = w.astype(compute_dtype)                 # bf16 resident weight
    res = input_tensor                           # residual stays in its own dtype
    if rows_p != rows:
        pad = rows_p - rows
        hs = jnp.pad(hs, ((0, pad), (0, 0)))
        res = jnp.pad(res, ((0, pad), (0, 0)))

    b2 = b.reshape(1, hidden)
    gamma2 = gamma.reshape(1, hidden)
    beta2 = beta.reshape(1, hidden)

    est = _block_bytes(tm, inter, hidden, cbytes, rbytes, obytes)
    vmem_limit = int(min(max(est * 5 // 4 + (4 << 20), 32 << 20), 64 << 20))

    cost = pl.CostEstimate(
        flops=2 * rows_p * inter * hidden,
        transcendentals=0,
        bytes_accessed=(hs.size * cbytes + wc.size * cbytes
                        + res.size * rbytes + rows_p * hidden * obytes
                        + 3 * hidden * 4),
    )

    aliases = {}
    if alias_residual and rows_p == rows and res.dtype == out_dtype:
        aliases = {3: 0}  # write output in place of the residual buffer

    grid = (rows_p // tm,)
    out = pl.pallas_call(
        bert_output_kernel,
        out_shape=jax.ShapeDtypeStruct((rows_p, hidden), out_dtype),
        grid_spec=pltpu.PrefetchScalarGridSpec(
            num_scalar_prefetch=0,
            grid=grid,
            in_specs=[
                pl.BlockSpec((tm, inter), lambda i: (i, 0)),      # activation tile
                pl.BlockSpec((inter, hidden), lambda i: (0, 0)),  # dense weight (resident)
                pl.BlockSpec((1, hidden), lambda i: (0, 0)),      # dense bias
                pl.BlockSpec((tm, hidden), lambda i: (i, 0)),     # residual tile
                pl.BlockSpec((1, hidden), lambda i: (0, 0)),      # LN gamma
                pl.BlockSpec((1, hidden), lambda i: (0, 0)),      # LN beta
            ],
            out_specs=pl.BlockSpec((tm, hidden), lambda i: (i, 0)),
        ),
        compiler_params=pltpu.CompilerParams(
            dimension_semantics=("parallel",),
            vmem_limit_bytes=vmem_limit),
        cost_estimate=cost,
        input_output_aliases=aliases,
    )(hs, wc, b2, res, gamma2, beta2)

    if rows_p != rows:
        out = out[:rows]
    return out


def _reference(hidden_states, input_tensor, w, b, gamma, beta):
    x = hidden_states @ w + b + input_tensor
    mu = x.mean(-1, keepdims=True)
    var = ((x - mu) ** 2).mean(-1, keepdims=True)
    return (x - mu) / jnp.sqrt(var + LN_EPS) * gamma + beta


if __name__ == "__main__":
    # Small config: batch=2, seq=8, hidden=32, intermediate=64
    batch, seq, hidden, intermediate = 2, 8, 32, 64
    rows = batch * seq

    key = jax.random.PRNGKey(0)
    k1, k2, k3, k4 = jax.random.split(key, 4)

    hidden_states = jax.random.normal(k1, (rows, intermediate), dtype=jnp.float32)
    input_tensor = jax.random.normal(k2, (rows, hidden), dtype=jnp.float32)

    # Deterministic synthetic parameters (shapes match nn.Linear / LayerNorm)
    w = jax.random.normal(k3, (intermediate, hidden), dtype=jnp.float32) * 0.02
    b = jax.random.normal(k4, (hidden,), dtype=jnp.float32) * 0.02
    gamma = jnp.ones((hidden,), dtype=jnp.float32)
    beta = jnp.zeros((hidden,), dtype=jnp.float32)

    ref = _reference(hidden_states, input_tensor, w, b, gamma, beta)

    # f32 compute path: tight check.
    out_f32 = bert_output(hidden_states, input_tensor, w, b, gamma, beta,
                          compute_dtype=jnp.float32)
    jax.block_until_ready(out_f32)
    assert jnp.allclose(out_f32, ref, atol=1e-5, rtol=1e-5), "f32 mismatch vs reference"

    # Default bf16-matmul path (production config): looser tolerance.
    out_bf16 = bert_output(hidden_states, input_tensor, w, b, gamma, beta)
    jax.block_until_ready(out_bf16)
    assert jnp.allclose(out_bf16, ref, atol=3e-2, rtol=3e-2), "bf16 mismatch vs reference"

    # Ragged row count exercises the padding path (rows not a multiple of 8).
    out_ragged = bert_output(hidden_states[:13], input_tensor[:13], w, b, gamma, beta,
                             compute_dtype=jnp.float32)
    jax.block_until_ready(out_ragged)
    assert jnp.allclose(out_ragged, ref[:13], atol=1e-5, rtol=1e-5), "ragged mismatch"

    print("KERNEL_OK")
</pallas_src>

<mosaic_0001>
module attributes {stable_mosaic.version = 11 : i64} {
  func.func @bert_output_kernel(%arg0: i32, %arg1: memref<16x64xf32, #tpu.memory_space<vmem>>, %arg2: memref<64x32xf32, #tpu.memory_space<vmem>>, %arg3: memref<1x32xf32, #tpu.memory_space<vmem>>, %arg4: memref<16x32xf32, #tpu.memory_space<vmem>>, %arg5: memref<1x32xf32, #tpu.memory_space<vmem>>, %arg6: memref<1x32xf32, #tpu.memory_space<vmem>>, %arg7: memref<16x32xf32, #tpu.memory_space<vmem>>) attributes {dimension_semantics = [#tpu.dimension_semantics<parallel>], iteration_bounds = array<i64: 1>, scalar_prefetch = 0 : i64, scratch_operands = 0 : i64, tpu.core_type = #tpu.core_type<tc>, window_params = [{transform_indices = @transform_0, window_bounds = array<i64: 16, 64>}, {pipeline_mode = #tpu.pipeline_mode<synchronous>, transform_indices = @transform_1, window_bounds = array<i64: 64, 32>}, {pipeline_mode = #tpu.pipeline_mode<synchronous>, transform_indices = @transform_2, window_bounds = array<i64: 1, 32>}, {transform_indices = @transform_3, window_bounds = array<i64: 16, 32>}, {pipeline_mode = #tpu.pipeline_mode<synchronous>, transform_indices = @transform_4, window_bounds = array<i64: 1, 32>}, {pipeline_mode = #tpu.pipeline_mode<synchronous>, transform_indices = @transform_5, window_bounds = array<i64: 1, 32>}, {transform_indices = @transform_6, window_bounds = array<i64: 16, 32>}]} {
    %c0 = arith.constant 0 : index
    %c0_0 = arith.constant 0 : index
    %0 = vector.load %arg1[%c0, %c0_0] : memref<16x64xf32, #tpu.memory_space<vmem>>, vector<16x64xf32>
    %c0_1 = arith.constant 0 : index
    %c0_2 = arith.constant 0 : index
    %1 = vector.load %arg2[%c0_1, %c0_2] : memref<64x32xf32, #tpu.memory_space<vmem>>, vector<64x32xf32>
    %cst = arith.constant dense<0.000000e+00> : vector<16x32xf32>
    %2 = tpu.matmul %0, %1, %cst {dimension_numbers = #tpu.dot_dimension_numbers<[1], [0], [0], [1], [0, 0, 1, 1], [], []>} : vector<16x64xf32>, vector<64x32xf32>, vector<16x32xf32> -> vector<16x32xf32>
    %c0_3 = arith.constant 0 : index
    %c0_4 = arith.constant 0 : index
    %3 = vector.load %arg3[%c0_3, %c0_4] : memref<1x32xf32, #tpu.memory_space<vmem>>, vector<1x32xf32>
    %4 = vector.broadcast %3 : vector<1x32xf32> to vector<16x32xf32>
    %5 = arith.addf %2, %4 : vector<16x32xf32>
    %c0_5 = arith.constant 0 : index
    %c0_6 = arith.constant 0 : index
    %6 = vector.load %arg4[%c0_5, %c0_6] : memref<16x32xf32, #tpu.memory_space<vmem>>, vector<16x32xf32>
    %7 = arith.addf %5, %6 : vector<16x32xf32>
    %cst_7 = arith.constant dense<0.000000e+00> : vector<16xf32>
    %8 = vector.multi_reduction <add>, %7, %cst_7 [1] : vector<16x32xf32> to vector<16xf32>
    %9 = vector.shape_cast %8 : vector<16xf32> to vector<16x1xf32>
    %cst_8 = arith.constant 3.200000e+01 : f32
    %10 = vector.broadcast %cst_8 : f32 to vector<16x1xf32>
    %11 = arith.divf %9, %10 : vector<16x1xf32>
    %12 = vector.broadcast %11 : vector<16x1xf32> to vector<16x32xf32>
    %13 = arith.subf %7, %12 : vector<16x32xf32>
    %14 = arith.mulf %13, %13 : vector<16x32xf32>
    %cst_9 = arith.constant dense<0.000000e+00> : vector<16xf32>
    %15 = vector.multi_reduction <add>, %14, %cst_9 [1] : vector<16x32xf32> to vector<16xf32>
    %16 = vector.shape_cast %15 : vector<16xf32> to vector<16x1xf32>
    %cst_10 = arith.constant 3.200000e+01 : f32
    %17 = vector.broadcast %cst_10 : f32 to vector<16x1xf32>
    %18 = arith.divf %16, %17 : vector<16x1xf32>
    %cst_11 = arith.constant 9.99999996E-13 : f32
    %19 = vector.broadcast %cst_11 : f32 to vector<16x1xf32>
    %20 = arith.addf %18, %19 : vector<16x1xf32>
    %21 = math.rsqrt %20 : vector<16x1xf32>
    %22 = vector.broadcast %21 : vector<16x1xf32> to vector<16x32xf32>
    %23 = arith.mulf %13, %22 : vector<16x32xf32>
    %c0_12 = arith.constant 0 : index
    %c0_13 = arith.constant 0 : index
    %24 = vector.load %arg5[%c0_12, %c0_13] : memref<1x32xf32, #tpu.memory_space<vmem>>, vector<1x32xf32>
    %25 = vector.broadcast %24 : vector<1x32xf32> to vector<16x32xf32>
    %26 = arith.mulf %23, %25 : vector<16x32xf32>
    %c0_14 = arith.constant 0 : index
    %c0_15 = arith.constant 0 : index
    %27 = vector.load %arg6[%c0_14, %c0_15] : memref<1x32xf32, #tpu.memory_space<vmem>>, vector<1x32xf32>
    %28 = vector.broadcast %27 : vector<1x32xf32> to vector<16x32xf32>
    %29 = arith.addf %26, %28 : vector<16x32xf32>
    %c0_16 = arith.constant 0 : index
    %c0_17 = arith.constant 0 : index
    %30 = vector.load %arg7[%c0_16, %c0_17] : memref<16x32xf32, #tpu.memory_space<vmem>>, vector<16x32xf32>
    tpu.vector_store %arg7[%c0_16, %c0_17], %29 {strides = array<i32>} : memref<16x32xf32, #tpu.memory_space<vmem>>, vector<16x32xf32>,
    return
  }
  func.func @transform_0(%arg0: i32) -> (i32, i32) {
    %c0_i32 = arith.constant 0 : i32
    %c0_i32_0 = arith.constant 0 : i32
    return %arg0, %c0_i32 : i32, i32
  }
  func.func @transform_1(%arg0: i32) -> (i32, i32) {
    %c0_i32 = arith.constant 0 : i32
    %c0_i32_0 = arith.constant 0 : i32
    %c0_i32_1 = arith.constant 0 : i32
    return %c0_i32, %c0_i32_0 : i32, i32
  }
  func.func @transform_2(%arg0: i32) -> (i32, i32) {
    %c0_i32 = arith.constant 0 : i32
    %c0_i32_0 = arith.constant 0 : i32
    %c0_i32_1 = arith.constant 0 : i32
    return %c0_i32, %c0_i32_0 : i32, i32
  }
  func.func @transform_3(%arg0: i32) -> (i32, i32) {
    %c0_i32 = arith.constant 0 : i32
    %c0_i32_0 = arith.constant 0 : i32
    return %arg0, %c0_i32 : i32, i32
  }
  func.func @transform_4(%arg0: i32) -> (i32, i32) {
    %c0_i32 = arith.constant 0 : i32
    %c0_i32_0 = arith.constant 0 : i32
    %c0_i32_1 = arith.constant 0 : i32
    return %c0_i32, %c0_i32_0 : i32, i32
  }
  func.func @transform_5(%arg0: i32) -> (i32, i32) {
    %c0_i32 = arith.constant 0 : i32
    %c0_i32_0 = arith.constant 0 : i32
    %c0_i32_1 = arith.constant 0 : i32
    return %c0_i32, %c0_i32_0 : i32, i32
  }
  func.func @transform_6(%arg0: i32) -> (i32, i32) {
    %c0_i32 = arith.constant 0 : i32
    %c0_i32_0 = arith.constant 0 : i32
    return %arg0, %c0_i32 : i32, i32
  }
}

</mosaic_0001>

<llo_original>
// kernel: tpu_custom_call.1
$region0: #{tpu_custom_call.1}
  #allocation0 [shape = 'u32[]', space=smem, size = 0x4, offset = 0x4, fixed_abs, tag = 'smem constant byte address 0x4 - core index']
  #allocation1 [shape = 'u32[72,128]{1,0:T(1,128)}', space=vmem, size = 0x9000, scoped, tag = 'internal scratch']
  %s0 = inlined_call_operand.vmem [shape: f32[16,64], index: 0, kind: input, shape index: {}]
  %s1 = inlined_call_operand.vmem [shape: f32[64,32], index: 1, kind: input, shape index: {}]
  %s2 = inlined_call_operand.vmem [shape: f32[1,32], index: 2, kind: input, shape index: {}]
  %s3 = inlined_call_operand.vmem [shape: f32[16,32], index: 3, kind: input, shape index: {}]
  %s4 = inlined_call_operand.vmem [shape: f32[1,32], index: 4, kind: input, shape index: {}]
  %s5 = inlined_call_operand.vmem [shape: f32[1,32], index: 5, kind: input, shape index: {}]
  %s6 = inlined_call_operand.hbm [shape: f32[16,32], index: 6, kind: output, shape index: {}]
  %s7 = sld [smem:[#allocation0]]
  $region34: #{tpu_custom_call.1} parent=0
    _
  %s9 = ssub.s32 1, %s7
  %s10 = scalar_select 0, %s9, %s7
  $region1: #{tpu_custom_call.1} parent=0
    #allocation2 [shape = 'u8[8192]{0}', space=vmem, size = 0x2000, scoped, tag = 'output window, operand 0, single buffered']
    #allocation3 [shape = 's32[1]{0}', space=sflag, size = 0x4, scoped, tag = 'scoped memory for tpu_custom_call.1']
    %11 = vsyncpa [#allocation3], 0
    // Predicated region
    $region2: #{tpu_custom_call.1} parent=1 // pred_check
      _
    $region3: #{tpu_custom_call.1} parent=1 // pred_check_branch
      %13 = sbr.rel (0) target = $region5
    $region4: #{tpu_custom_call.1} parent=1 // pred_region
      _
    $region5: #{tpu_custom_call.1} parent=1 // pred_fallthru
      _
    // Predicated region
    $region6: #{tpu_custom_call.1} parent=1 // pred_check
      _
    $region7: #{tpu_custom_call.1} parent=1 // pred_check_branch
      %15 = sbr.rel (0) target = $region9
    $region8: #{tpu_custom_call.1} parent=1 // pred_region
      _
    $region9: #{tpu_custom_call.1} parent=1 // pred_fallthru
      _
    // Predicated region
    $region10: #{tpu_custom_call.1} parent=1 // pred_check
      _
    $region11: #{tpu_custom_call.1} parent=1 // pred_check_branch
      %17 = sbr.rel (0) target = $region13
    $region12: #{tpu_custom_call.1} parent=1 // pred_region
      _
    $region13: #{tpu_custom_call.1} parent=1 // pred_fallthru
      _
    // Predicated region
    $region14: #{tpu_custom_call.1} parent=1 // pred_check
      _
    $region15: #{tpu_custom_call.1} parent=1 // pred_check_branch
      %19 = sbr.rel (0) target = $region17
    $region16: #{tpu_custom_call.1} parent=1 // pred_region
      _
    $region17: #{tpu_custom_call.1} parent=1 // pred_fallthru
      _
    // Predicated region
    $region18: #{tpu_custom_call.1} parent=1 // pred_check
      _
    $region19: #{tpu_custom_call.1} parent=1 // pred_check_branch
      %21 = sbr.rel (0) target = $region21
    $region20: #{tpu_custom_call.1} parent=1 // pred_region
      _
    $region21: #{tpu_custom_call.1} parent=1 // pred_fallthru
      _
    // Predicated region
    $region22: #{tpu_custom_call.1} parent=1 // pred_check
      _
    $region23: #{tpu_custom_call.1} parent=1 // pred_check_branch
      %23 = sbr.rel (0) target = $region25
    $region24: #{tpu_custom_call.1} parent=1 // pred_region
      _
    $region25: #{tpu_custom_call.1} parent=1 // pred_fallthru
      _
    %v24 = vld [vmem:[%s0] sm:$0xff]
    %v25 = vld [vmem:[%s0 + $0x8] sm:$0xff]
    %v26 = vld [vmem:[%s1] sm:$0xff]
    %v27 = vld [vmem:[%s1 + $0x8] sm:$0xff]
    %v28 = vld [vmem:[%s1 + $0x10] sm:$0xff]
    %v29 = vld [vmem:[%s1 + $0x18] sm:$0xff]
    %v30 = vld [vmem:[%s1 + $0x20] sm:$0xff]
    %v31 = vld [vmem:[%s1 + $0x28] sm:$0xff]
    %v32 = vld [vmem:[%s1 + $0x30] sm:$0xff]
    %v33 = vld [vmem:[%s1 + $0x38] sm:$0xff]
    %v34 = vld [vmem:[%s2] sm:$0x1]
    %v36 = vperm.slane %v34, 0
    %vm38 = vcmask 523264
    %v40 = vsel %vm38, %v24, 0
    %v43 = vsel %vm38, %v25, 0
    %45 = vmatpush.msra.mxu0 0.0
    %46 = vmatpush.msra.mxu0 0.0
    %47 = vmatpush.msra.mxu0 0.0
    %48 = vmatpush.msra.mxu0 0.0
    %49 = vmatpush.msra.mxu0 0.0
    %50 = vmatpush.msra.mxu0 0.0
    %51 = vmatpush.msra.mxu0 0.0
    %52 = vmatpush.msra.mxu0 0.0
    %53 = vmatpush.msra.mxu0 %v33
    %54 = vmatpush.msra.mxu0 %v32
    %55 = vmatpush.msra.mxu0 %v31
    %56 = vmatpush.msra.mxu0 %v30
    %57 = vmatpush.msra.mxu0 %v29
    %58 = vmatpush.msra.mxu0 %v28
    %59 = vmatpush.msra.mxu0 %v27
    %60 = vmatpush.msra.mxu0 %v26
    %61 = vmatmul.f32.gmra.mxu0 %v40
    %v62 = vpop.f32.mrf.mxu0
    %v63 = vadd.f32 %v36, %v62
    %64 = vmatmul.f32.gmra.mxu0 %v43
    %v65 = vpop.f32.mrf.mxu0
    %v66 = vadd.f32 %v36, %v65
    %67 = vdwg.mxu0
    %v68 = vld [vmem:[%s3] sm:$0xff]
    %v69 = vld [vmem:[%s3 + $0x8] sm:$0xff]
    %v70 = vadd.f32 %v63, %v68
    %v71 = vadd.f32 %v66, %v69
    %vm72 = vcmask 261120
    %v73 = vsel %vm72, %v70, 0.0
    %74 = vadd.xlane.f32.xlu0 %v73
    %v75 = vpop.xlane.xlu0 %74
    %v76 = vsel %vm72, %v71, 0.0
    %77 = vadd.xlane.f32.xlu0 %v76
    %v78 = vpop.xlane.xlu0 %77
    %v79 = vrcp.pop 32.0
    %v80 = vmul.f32 32.0, %v79
    %v81 = vsub.f32 1.0, %v80
    %v82 = vmul.f32 %v79, %v81
    %v83 = vadd.f32 %v79, %v82
    %vm84 = vweird.f32 %v79
    %v85 = vsel %vm84, %v79, %v83
    %v86 = vmul.f32 %v75, %v85
    %v87 = vmul.f32 %v78, %v85
    %v88 = vsub.f32 %v70, %v86
    %v89 = vsub.f32 %v71, %v87
    %v90 = vmul.f32 %v88, %v88
    %v91 = vmul.f32 %v89, %v89
    %v92 = vsel %vm72, %v90, 0.0
    %93 = vadd.xlane.f32.xlu0 %v92
    %v94 = vpop.xlane.xlu0 %93
    %v95 = vsel %vm72, %v91, 0.0
    %96 = vadd.xlane.f32.xlu0 %v95
    %v97 = vpop.xlane.xlu0 %96
    %v98 = vmul.f32 %v94, %v85
    %v99 = vmul.f32 %v97, %v85
    %v100 = vadd.f32 %v98, 1e-12
    %v101 = vadd.f32 %v99, 1e-12
    %v102 = vrsqrt.pop %v100
    %v103 = vmul.f32 %v102, %v100
    %v104 = vmul.f32 %v103, %v102
    %v105 = vmul.f32 0.5, %v104
    %v106 = vsub.f32 1.5, %v105
    %v107 = vmul.f32 %v102, %v106
    %vm108 = vweird.f32 %v100
    %vm109 = vweird.f32 %v102
    %vm110 = vmor %vm108, %vm109
    %v111 = vsel %vm110, %v102, %v107
    %v112 = vrsqrt.pop %v101
    %v113 = vmul.f32 %v112, %v101
    %v114 = vmul.f32 %v113, %v112
    %v115 = vmul.f32 0.5, %v114
    %v116 = vsub.f32 1.5, %v115
    %v117 = vmul.f32 %v112, %v116
    %vm118 = vweird.f32 %v101
    %vm119 = vweird.f32 %v112
    %vm120 = vmor %vm118, %vm119
    %v121 = vsel %vm120, %v112, %v117
    %v122 = vmul.f32 %v88, %v111
    %v123 = vmul.f32 %v89, %v121
    %v124 = vld [vmem:[%s4] sm:$0x1]
    %v126 = vperm.slane %v124, 0
    %v128 = vmul.f32 %v122, %v126
    %v129 = vmul.f32 %v123, %v126
    %v130 = vld [vmem:[%s5] sm:$0x1]
    %v132 = vperm.slane %v130, 0
    %v134 = vadd.f32 %v128, %v132
    %v135 = vadd.f32 %v129, %v132
    %136 = vst.msk [vmem:[#allocation2] sm:$0xff] %vm72, %v134
    %137 = vst.msk [vmem:[#allocation2 + $0x8] sm:$0xff] %vm72, %v135
    // Predicated region
    $region26: #{tpu_custom_call.1} parent=1 // pred_check
      _
    $region27: #{tpu_custom_call.1} parent=1 // pred_check_branch
      %139 = sbr.rel (0) target = $region29
    $region28: #{tpu_custom_call.1} parent=1 // pred_region
      %141 = vsyncadd [#allocation3], 0
      %s142 = sshll.u32 [#allocation2], 4
      %s143 = int_to_ptr.vmem [resolvable:$true] %s142
      %s144 = sshll.u32 %s6, 4
      %s145 = int_to_ptr.hbm [resolvable:$true] %s144
      %150 = dma.vmem_to_hbm [thread:$0]  %s143, 256, %s145, [#allocation3], 128, 128, 8
    $region29: #{tpu_custom_call.1} parent=1 // pred_fallthru
      _
    // Predicated region
    $region30: #{tpu_custom_call.1} parent=1 // pred_check
      _
    $region31: #{tpu_custom_call.1} parent=1 // pred_check_branch
      %152 = sbr.rel (0) target = $region33
    $region32: #{tpu_custom_call.1} parent=1 // pred_region
      %154 = dma.done [#allocation3], 256
    $region33: #{tpu_custom_call.1} parent=1 // pred_fallthru
      _
    %155 = vsyncpa [#allocation3], 1

</llo_original>
